<compile_context>
chip_gen: v7x
topology: tpu7x:2x2x1
jax: 0.10.0
libtpu: 0.0.40
codegen_flags: <defaults>
</compile_context>

<pallas_src>
import math
import jax
import jax.numpy as jnp
from jax.experimental import pallas as pl


def _drnn_cell_kernel(xin_ref, wbig_ref, c_ref, wp_ref, bp_ref,
                      out_ref, state_ref):
    H2 = c_ref.shape[-1]          # 2 * hidden_size, cell-packed [a | f]

    # One fused, lane-dense matmul computes all 8 gate pre-activations of
    # both LSTM cells, biases folded in via the ones column of xin.
    gates = jnp.dot(xin_ref[...], wbig_ref[...],
                    preferred_element_type=jnp.float32)       # [B, 8H]

    # Whole-vreg sigmoid, one tanh on a 128-aligned slice, then static slices.
    sig = jax.nn.sigmoid(gates)
    i = sig[:, 0:H2]                                          # [B, 2H]
    f = sig[:, H2:2 * H2]
    o = sig[:, 3 * H2:4 * H2]
    g = jnp.tanh(gates[:, 2 * H2:3 * H2])

    # Packed elementwise state update for both cells at once.
    c_new = f * c_ref[...] + i * g                            # [B, 2H] = [ca'|cf']
    h_new = o * jnp.tanh(c_new)                               # [B, 2H] = [ha'|hf']

    # Prediction head: h_new is already cat([ha', hf'], dim=1) -> no concat.
    pred = jnp.dot(h_new, wp_ref[...],
                   preferred_element_type=jnp.float32) + bp_ref[...]
    out_ref[...] = jnp.tanh(pred)

    # Single lane-dense [B, 4H] state output: [ha' | hf' | ca' | cf'].
    state_ref[:, 0:H2] = h_new
    state_ref[:, H2:2 * H2] = c_new


def pack_drnn_params(params, input_size, hidden_size):
    """One-time packing of torch-layout weights into the fused kernel layout."""
    In, H = input_size, hidden_size
    d_raw = 2 * (In + H) + 1                     # [xa | ha | xf | hf | 1]
    Dp = ((d_raw + 127) // 128) * 128            # pad contraction dim to 128

    wih_a, whh_a = params["a"]["w_ih"], params["a"]["w_hh"]
    b_a = params["a"]["b_ih"] + params["a"]["b_hh"]
    wih_f, whh_f = params["f"]["w_ih"], params["f"]["w_hh"]
    b_f = params["f"]["b_ih"] + params["f"]["b_hh"]

    row_xa, row_ha = 0, In
    row_xf, row_hf = In + H, 2 * In + H
    row_b = 2 * (In + H)

    # Columns: 4 gate groups (i, f, g, o), each 2H wide = [cell a | cell f].
    W = jnp.zeros((Dp, 8 * H), jnp.float32)
    for k in range(4):                           # torch gate order (i, f, g, o)
        ca, cf = 2 * H * k, 2 * H * k + H
        W = W.at[row_xa:row_xa + In, ca:ca + H].set(wih_a[k * H:(k + 1) * H, :].T)
        W = W.at[row_ha:row_ha + H,  ca:ca + H].set(whh_a[k * H:(k + 1) * H, :].T)
        W = W.at[row_b,              ca:ca + H].set(b_a[k * H:(k + 1) * H])
        W = W.at[row_xf:row_xf + In, cf:cf + H].set(wih_f[k * H:(k + 1) * H, :].T)
        W = W.at[row_hf:row_hf + H,  cf:cf + H].set(whh_f[k * H:(k + 1) * H, :].T)
        W = W.at[row_b,              cf:cf + H].set(b_f[k * H:(k + 1) * H])

    return {
        "W_big": W,                                       # [Dp, 8H]
        "wp_t": params["pred"]["w"].T,                    # [2H, H]
        "bp": params["pred"]["b"].reshape(1, H),          # [1, H]
        "Dp": Dp, "input_size": In, "hidden_size": H,
    }


def drnn_cell_forward(xa, xf, ha, hf, packed):
    """Pallas wrapper. ha/hf are (h, c) tuples, each [B, H]."""
    B = xa.shape[0]
    In, H, Dp = packed["input_size"], packed["hidden_size"], packed["Dp"]
    d_raw = 2 * (In + H) + 1

    ones = jnp.ones((B, 1), jnp.float32)
    x_pack = jnp.concatenate([xa, ha[0], xf, hf[0], ones], axis=1)
    if Dp > d_raw:
        x_pack = jnp.pad(x_pack, ((0, 0), (0, Dp - d_raw)))
    c_pack = jnp.concatenate([ha[1], hf[1]], axis=1)          # [B, 2H] = [ca | cf]

    args = (x_pack, packed["W_big"], c_pack, packed["wp_t"], packed["bp"])

    def full_spec(x):
        return pl.BlockSpec(x.shape, lambda: (0,) * x.ndim)

    out_shapes = (
        jax.ShapeDtypeStruct((B, H), jnp.float32),            # prediction
        jax.ShapeDtypeStruct((B, 4 * H), jnp.float32),        # [ha'|hf'|ca'|cf']
    )

    out, state = pl.pallas_call(
        _drnn_cell_kernel,
        out_shape=out_shapes,
        in_specs=[full_spec(a) for a in args],
        out_specs=tuple(pl.BlockSpec(s.shape, lambda: (0, 0)) for s in out_shapes),
    )(*args)

    hah = state[:, 0:H]
    hfh = state[:, H:2 * H]
    hac = state[:, 2 * H:3 * H]
    hfc = state[:, 3 * H:4 * H]
    return out, (hah, hac), (hfh, hfc)


def _init_params(key, input_size, hidden_size):
    """Deterministic init mimicking torch's uniform(-1/sqrt(H), 1/sqrt(H))."""
    k = 1.0 / math.sqrt(hidden_size)

    def u(key, shape):
        return jax.random.uniform(key, shape, jnp.float32, minval=-k, maxval=k)

    keys = jax.random.split(key, 11)
    return {
        "a": {
            "w_ih": u(keys[0], (4 * hidden_size, input_size)),
            "w_hh": u(keys[1], (4 * hidden_size, hidden_size)),
            "b_ih": u(keys[2], (4 * hidden_size,)),
            "b_hh": u(keys[3], (4 * hidden_size,)),
        },
        "f": {
            "w_ih": u(keys[4], (4 * hidden_size, input_size)),
            "w_hh": u(keys[5], (4 * hidden_size, hidden_size)),
            "b_ih": u(keys[6], (4 * hidden_size,)),
            "b_hh": u(keys[7], (4 * hidden_size,)),
        },
        "pred": {
            "w": u(keys[8], (hidden_size, 2 * hidden_size)),
            "b": u(keys[9], (hidden_size,)),
        },
    }


def _reference_forward(xa, xf, ha, hf, params):
    """Pure-JAX reference reproducing torch LSTMCell / Linear semantics."""
    def lstm(x, hc, p):
        h, c = hc
        gates = x @ p["w_ih"].T + p["b_ih"] + h @ p["w_hh"].T + p["b_hh"]
        i, f, g, o = jnp.split(gates, 4, axis=1)
        i, f, o = jax.nn.sigmoid(i), jax.nn.sigmoid(f), jax.nn.sigmoid(o)
        g = jnp.tanh(g)
        c_new = f * c + i * g
        return jnp.tanh(c_new) * o, c_new

    h_ia = lstm(xa, ha, params["a"])
    h_if = lstm(xf, hf, params["f"])
    cat = jnp.concatenate([h_ia[0], h_if[0]], axis=1)
    out = jnp.tanh(cat @ params["pred"]["w"].T + params["pred"]["b"])
    return out, h_ia, h_if


if __name__ == "__main__":
    B, INPUT, HIDDEN = 2, 16, 32

    key = jax.random.PRNGKey(0)
    kp, kxa, kxf, kha, khc, kfa, kfc = jax.random.split(key, 7)
    params = _init_params(kp, INPUT, HIDDEN)
    packed = pack_drnn_params(params, INPUT, HIDDEN)

    xa = jax.random.normal(kxa, (B, INPUT), jnp.float32)
    xf = jax.random.normal(kxf, (B, INPUT), jnp.float32)
    ha = (jax.random.normal(kha, (B, HIDDEN), jnp.float32),
          jax.random.normal(khc, (B, HIDDEN), jnp.float32))
    hf = (jax.random.normal(kfa, (B, HIDDEN), jnp.float32),
          jax.random.normal(kfc, (B, HIDDEN), jnp.float32))

    out, h_ia, h_if = drnn_cell_forward(xa, xf, ha, hf, packed)
    jax.block_until_ready(out)

    # Correctness check against a pure-JAX reference.
    ref_out, ref_ia, ref_if = _reference_forward(xa, xf, ha, hf, params)
    for got, ref in [(out, ref_out), (h_ia[0], ref_ia[0]), (h_ia[1], ref_ia[1]),
                     (h_if[0], ref_if[0]), (h_if[1], ref_if[1])]:
        assert jnp.allclose(got, ref, atol=1e-5, rtol=1e-5)

    print("KERNEL_OK")
</pallas_src>

<mosaic_0001>
module attributes {stable_mosaic.version = 11 : i64} {
  func.func @_drnn_cell_kernel(%arg0: memref<2x128xf32, #tpu.memory_space<vmem>>, %arg1: memref<128x256xf32, #tpu.memory_space<vmem>>, %arg2: memref<2x64xf32, #tpu.memory_space<vmem>>, %arg3: memref<64x32xf32, #tpu.memory_space<vmem>>, %arg4: memref<1x32xf32, #tpu.memory_space<vmem>>, %arg5: memref<2x32xf32, #tpu.memory_space<vmem>>, %arg6: memref<2x128xf32, #tpu.memory_space<vmem>>) attributes {dimension_semantics = [], scalar_prefetch = 0 : i64, scratch_operands = 0 : i64, tpu.core_type = #tpu.core_type<tc>} {
    %c0 = arith.constant 0 : index
    %c0_0 = arith.constant 0 : index
    %0 = vector.load %arg0[%c0, %c0_0] : memref<2x128xf32, #tpu.memory_space<vmem>>, vector<2x128xf32>
    %c0_1 = arith.constant 0 : index
    %c0_2 = arith.constant 0 : index
    %1 = vector.load %arg1[%c0_1, %c0_2] : memref<128x256xf32, #tpu.memory_space<vmem>>, vector<128x256xf32>
    %cst = arith.constant dense<0.000000e+00> : vector<2x256xf32>
    %2 = tpu.matmul %0, %1, %cst {dimension_numbers = #tpu.dot_dimension_numbers<[1], [0], [0], [1], [0, 0, 1, 1], [], []>} : vector<2x128xf32>, vector<128x256xf32>, vector<2x256xf32> -> vector<2x256xf32>
    %3 = arith.negf %2 : vector<2x256xf32>
    %4 = math.exp %3 : vector<2x256xf32>
    %cst_3 = arith.constant 1.000000e+00 : f32
    %5 = vector.broadcast %cst_3 : f32 to vector<2x256xf32>
    %6 = arith.addf %5, %4 : vector<2x256xf32>
    %7 = arith.divf %5, %6 : vector<2x256xf32>
    %8 = vector.extract_strided_slice %7 {offsets = [0, 0], sizes = [2, 64], strides = [1, 1]} : vector<2x256xf32> to vector<2x64xf32>
    %9 = vector.extract_strided_slice %7 {offsets = [0, 64], sizes = [2, 64], strides = [1, 1]} : vector<2x256xf32> to vector<2x64xf32>
    %10 = vector.extract_strided_slice %7 {offsets = [0, 192], sizes = [2, 64], strides = [1, 1]} : vector<2x256xf32> to vector<2x64xf32>
    %11 = vector.extract_strided_slice %2 {offsets = [0, 128], sizes = [2, 64], strides = [1, 1]} : vector<2x256xf32> to vector<2x64xf32>
    %12 = math.tanh %11 : vector<2x64xf32>
    %c0_4 = arith.constant 0 : index
    %c0_5 = arith.constant 0 : index
    %13 = vector.load %arg2[%c0_4, %c0_5] : memref<2x64xf32, #tpu.memory_space<vmem>>, vector<2x64xf32>
    %14 = arith.mulf %9, %13 : vector<2x64xf32>
    %15 = arith.mulf %8, %12 : vector<2x64xf32>
    %16 = arith.addf %14, %15 : vector<2x64xf32>
    %17 = math.tanh %16 : vector<2x64xf32>
    %18 = arith.mulf %10, %17 : vector<2x64xf32>
    %c0_6 = arith.constant 0 : index
    %c0_7 = arith.constant 0 : index
    %19 = vector.load %arg3[%c0_6, %c0_7] : memref<64x32xf32, #tpu.memory_space<vmem>>, vector<64x32xf32>
    %cst_8 = arith.constant dense<0.000000e+00> : vector<2x32xf32>
    %20 = tpu.matmul %18, %19, %cst_8 {dimension_numbers = #tpu.dot_dimension_numbers<[1], [0], [0], [1], [0, 0, 1, 1], [], []>} : vector<2x64xf32>, vector<64x32xf32>, vector<2x32xf32> -> vector<2x32xf32>
    %c0_9 = arith.constant 0 : index
    %c0_10 = arith.constant 0 : index
    %21 = vector.load %arg4[%c0_9, %c0_10] : memref<1x32xf32, #tpu.memory_space<vmem>>, vector<1x32xf32>
    %22 = vector.broadcast %21 : vector<1x32xf32> to vector<2x32xf32>
    %23 = arith.addf %20, %22 : vector<2x32xf32>
    %24 = math.tanh %23 : vector<2x32xf32>
    %c0_11 = arith.constant 0 : index
    %c0_12 = arith.constant 0 : index
    %25 = vector.load %arg5[%c0_11, %c0_12] : memref<2x32xf32, #tpu.memory_space<vmem>>, vector<2x32xf32>
    tpu.vector_store %arg5[%c0_11, %c0_12], %24 {strides = array<i32>} : memref<2x32xf32, #tpu.memory_space<vmem>>, vector<2x32xf32>,
    %c0_13 = arith.constant 0 : index
    %c0_14 = arith.constant 0 : index
    %26 = vector.load %arg6[%c0_13, %c0_14] : memref<2x128xf32, #tpu.memory_space<vmem>>, vector<2x64xf32>
    tpu.vector_store %arg6[%c0_13, %c0_14], %18 {strides = array<i32>} : memref<2x128xf32, #tpu.memory_space<vmem>>, vector<2x64xf32>,
    %c0_15 = arith.constant 0 : index
    %c64 = arith.constant 64 : index
    %27 = vector.load %arg6[%c0_15, %c64] : memref<2x128xf32, #tpu.memory_space<vmem>>, vector<2x64xf32>
    tpu.vector_store %arg6[%c0_15, %c64], %16 {strides = array<i32>} : memref<2x128xf32, #tpu.memory_space<vmem>>, vector<2x64xf32>,
    return
  }
}

</mosaic_0001>

<llo_original>
// kernel: tpu_custom_call.1
$region0: #{tpu_custom_call.1}
  #allocation0 [shape = 'u32[]', space=smem, size = 0x4, offset = 0x4, fixed_abs, tag = 'smem constant byte address 0x4 - core index']
  #allocation1 [shape = 'u32[144,128]{1,0:T(1,128)}', space=vmem, size = 0x12000, scoped, tag = 'internal scratch']
  %s0 = inlined_call_operand.vmem [shape: f32[2,128], index: 0, kind: input, shape index: {}]
  %s1 = inlined_call_operand.hbm [shape: f32[128,256], index: 1, kind: input, shape index: {}]
  %s2 = inlined_call_operand.vmem [shape: f32[2,64], index: 2, kind: input, shape index: {}]
  %s3 = inlined_call_operand.vmem [shape: f32[64,32], index: 3, kind: input, shape index: {}]
  %s4 = inlined_call_operand.vmem [shape: f32[1,32], index: 4, kind: input, shape index: {}]
  %s5 = inlined_call_operand.hbm [shape: f32[2,32], index: 5, kind: output, shape index: {0}]
  %s6 = inlined_call_operand.hbm [shape: f32[2,128], index: 6, kind: output, shape index: {1}]
  %7 = xla_tuple %s5, %s6
  %s8 = sld [smem:[#allocation0]]
  $region42: #{tpu_custom_call.1} parent=0
    _
  %s10 = ssub.s32 1, %s8
  %s11 = scalar_select 0, %s10, %s8
  $region1: #{tpu_custom_call.1} parent=0
    #allocation2 [shape = 'u8[131072]{0}', space=vmem, size = 0x20000, scoped, tag = 'input window, operand 1, single buffered']
    #allocation3 [shape = 's32[1]{0}', space=sflag, size = 0x4, scoped, tag = 'scoped memory for tpu_custom_call.1']
    #allocation4 [shape = 's32[1]{0}', space=sflag, size = 0x4, scoped, tag = 'scoped memory for tpu_custom_call.1']
    #allocation5 [shape = 'u8[1024]{0}', space=vmem, size = 0x400, scoped, tag = 'output window, operand 0, single buffered']
    #allocation6 [shape = 'u8[1024]{0}', space=vmem, size = 0x400, scoped, tag = 'output window, operand 1, single buffered']
    #allocation7 [shape = 's32[1]{0}', space=sflag, size = 0x4, scoped, tag = 'scoped memory for tpu_custom_call.1']
    %12 = vsyncpa [#allocation3], 0
    %13 = vsyncpa [#allocation4], 0
    %14 = vsyncpa [#allocation7], 0
    // Predicated region
    $region2: #{tpu_custom_call.1} parent=1 // pred_check
      _
    $region3: #{tpu_custom_call.1} parent=1 // pred_check_branch
      %16 = sbr.rel (0) target = $region5
    $region4: #{tpu_custom_call.1} parent=1 // pred_region
      _
    $region5: #{tpu_custom_call.1} parent=1 // pred_fallthru
      _
    // Predicated region
    $region6: #{tpu_custom_call.1} parent=1 // pred_check
      _
    $region7: #{tpu_custom_call.1} parent=1 // pred_check_branch
      %18 = sbr.rel (0) target = $region9
    $region8: #{tpu_custom_call.1} parent=1 // pred_region
      %s20 = ssub.s32 4096, 4096
      %21 = vsyncadd [#allocation3], %s20
      %s22 = sshll.u32 [#allocation2], 4
      %s23 = int_to_ptr.vmem [resolvable:$true] %s22
      %28 = dma.hbm_to_vmem [thread:$0]  %s1, 4096, %s23, [#allocation3], 256, 256, 16
    $region9: #{tpu_custom_call.1} parent=1 // pred_fallthru
      _
    // Predicated region
    $region10: #{tpu_custom_call.1} parent=1 // pred_check
      _
    $region11: #{tpu_custom_call.1} parent=1 // pred_check_branch
      %30 = sbr.rel (0) target = $region13
    $region12: #{tpu_custom_call.1} parent=1 // pred_region
      _
    $region13: #{tpu_custom_call.1} parent=1 // pred_fallthru
      _
    // Predicated region
    $region14: #{tpu_custom_call.1} parent=1 // pred_check
      _
    $region15: #{tpu_custom_call.1} parent=1 // pred_check_branch
      %32 = sbr.rel (0) target = $region17
    $region16: #{tpu_custom_call.1} parent=1 // pred_region
      _
    $region17: #{tpu_custom_call.1} parent=1 // pred_fallthru
      _
    // Predicated region
    $region18: #{tpu_custom_call.1} parent=1 // pred_check
      _
    $region19: #{tpu_custom_call.1} parent=1 // pred_check_branch
      %34 = sbr.rel (0) target = $region21
    $region20: #{tpu_custom_call.1} parent=1 // pred_region
      _
    $region21: #{tpu_custom_call.1} parent=1 // pred_fallthru
      _
    // Predicated region
    $region22: #{tpu_custom_call.1} parent=1 // pred_check
      _
    $region23: #{tpu_custom_call.1} parent=1 // pred_check_branch
      %36 = sbr.rel (0) target = $region25
    $region24: #{tpu_custom_call.1} parent=1 // pred_region
      %37 = dma.done [#allocation3], 4096
    $region25: #{tpu_custom_call.1} parent=1 // pred_fallthru
      _
    %v38 = vld [vmem:[%s0] sm:$0x3]
    %v39 = vld [vmem:[#allocation2] sm:$0xff]
    %v40 = vld [vmem:[#allocation2 + $0x8] sm:$0xff]
    %v41 = vld [vmem:[#allocation2 + $0x10] sm:$0xff]
    %v42 = vld [vmem:[#allocation2 + $0x18] sm:$0xff]
    %v43 = vld [vmem:[#allocation2 + $0x20] sm:$0xff]
    %v44 = vld [vmem:[#allocation2 + $0x28] sm:$0xff]
    %v45 = vld [vmem:[#allocation2 + $0x30] sm:$0xff]
    %v46 = vld [vmem:[#allocation2 + $0x38] sm:$0xff]
    %v47 = vld [vmem:[#allocation2 + $0x40] sm:$0xff]
    %v48 = vld [vmem:[#allocation2 + $0x48] sm:$0xff]
    %v49 = vld [vmem:[#allocation2 + $0x50] sm:$0xff]
    %v50 = vld [vmem:[#allocation2 + $0x58] sm:$0xff]
    %v51 = vld [vmem:[#allocation2 + $0x60] sm:$0xff]
    %v52 = vld [vmem:[#allocation2 + $0x68] sm:$0xff]
    %v53 = vld [vmem:[#allocation2 + $0x70] sm:$0xff]
    %v54 = vld [vmem:[#allocation2 + $0x78] sm:$0xff]
    %v55 = vld [vmem:[#allocation2 + $0x80] sm:$0xff]
    %v56 = vld [vmem:[#allocation2 + $0x88] sm:$0xff]
    %v57 = vld [vmem:[#allocation2 + $0x90] sm:$0xff]
    %v58 = vld [vmem:[#allocation2 + $0x98] sm:$0xff]
    %v59 = vld [vmem:[#allocation2 + $0xa0] sm:$0xff]
    %v60 = vld [vmem:[#allocation2 + $0xa8] sm:$0xff]
    %v61 = vld [vmem:[#allocation2 + $0xb0] sm:$0xff]
    %v62 = vld [vmem:[#allocation2 + $0xb8] sm:$0xff]
    %v63 = vld [vmem:[#allocation2 + $0xc0] sm:$0xff]
    %v64 = vld [vmem:[#allocation2 + $0xc8] sm:$0xff]
    %v65 = vld [vmem:[#allocation2 + $0xd0] sm:$0xff]
    %v66 = vld [vmem:[#allocation2 + $0xd8] sm:$0xff]
    %v67 = vld [vmem:[#allocation2 + $0xe0] sm:$0xff]
    %v68 = vld [vmem:[#allocation2 + $0xe8] sm:$0xff]
    %v69 = vld [vmem:[#allocation2 + $0xf0] sm:$0xff]
    %v70 = vld [vmem:[#allocation2 + $0xf8] sm:$0xff]
    %71 = vmatprep.subr.mxu0 %v40
    %72 = vmatpush1.msra.mxu0 %v39
    %73 = vmatprep.subr.mxu0 %v42
    %74 = vmatpush1.msra.mxu0 %v41
    %75 = vmatprep.subr.mxu0 %v44
    %76 = vmatpush1.msra.mxu0 %v43
    %77 = vmatprep.subr.mxu0 %v46
    %78 = vmatpush1.msra.mxu0 %v45
    %79 = vmatprep.subr.mxu0 %v48
    %80 = vmatpush1.msra.mxu0 %v47
    %81 = vmatprep.subr.mxu0 %v50
    %82 = vmatpush1.msra.mxu0 %v49
    %83 = vmatprep.subr.mxu0 %v52
    %84 = vmatpush1.msra.mxu0 %v51
    %85 = vmatprep.subr.mxu0 %v54
    %86 = vmatpush1.msra.mxu0 %v53
    %87 = vmatprep.subr.mxu0 %v56
    %88 = vmatpush1.msra.mxu0 %v55
    %89 = vmatprep.subr.mxu0 %v58
    %90 = vmatpush1.msra.mxu0 %v57
    %91 = vmatprep.subr.mxu0 %v60
    %92 = vmatpush1.msra.mxu0 %v59
    %93 = vmatprep.subr.mxu0 %v62
    %94 = vmatpush1.msra.mxu0 %v61
    %95 = vmatprep.subr.mxu0 %v64
    %96 = vmatpush1.msra.mxu0 %v63
    %97 = vmatprep.subr.mxu0 %v66
    %98 = vmatpush1.msra.mxu0 %v65
    %99 = vmatprep.subr.mxu0 %v68
    %100 = vmatpush1.msra.mxu0 %v67
    %101 = vmatprep.subr.mxu0 %v70
    %102 = vmatpush1.msra.mxu0 %v69
    %103 = vmatprep.subr.mxu0 0.0
    %104 = vmatpush1.msra.mxu0 0.0
    %105 = vmatprep.subr.mxu0 0.0
    %106 = vmatpush1.msra.mxu0 0.0
    %107 = vmatprep.subr.mxu0 0.0
    %108 = vmatpush1.msra.mxu0 0.0
    %109 = vmatprep.subr.mxu0 0.0
    %110 = vmatpush1.msra.mxu0 0.0
    %111 = vmatprep.subr.mxu0 0.0
    %112 = vmatpush1.msra.mxu0 0.0
    %113 = vmatprep.subr.mxu0 0.0
    %114 = vmatpush1.msra.mxu0 0.0
    %115 = vmatprep.subr.mxu0 0.0
    %116 = vmatpush1.msra.mxu0 0.0
    %117 = vmatprep.subr.mxu0 0.0
    %118 = vmatpush1.msra.mxu0 0.0
    %119 = vmatprep.subr.mxu0 0.0
    %120 = vmatpush1.msra.mxu0 0.0
    %121 = vmatprep.subr.mxu0 0.0
    %122 = vmatpush1.msra.mxu0 0.0
    %123 = vmatprep.subr.mxu0 0.0
    %124 = vmatpush1.msra.mxu0 0.0
    %125 = vmatprep.subr.mxu0 0.0
    %126 = vmatpush1.msra.mxu0 0.0
    %127 = vmatprep.subr.mxu0 0.0
    %128 = vmatpush1.msra.mxu0 0.0
    %129 = vmatprep.subr.mxu0 0.0
    %130 = vmatpush1.msra.mxu0 0.0
    %131 = vmatprep.subr.mxu0 0.0
    %132 = vmatpush1.msra.mxu0 0.0
    %133 = vmatprep.subr.mxu0 0.0
    %134 = vmatpush1.msra.mxu0 0.0
    %135 = vmatprep.mubr.f32.mxu0 0.0
    %136 = vmatmul.mubr.f32.gmra.mrb[0].mxu0 %v38
    %v137 = vpop.f32.mrb[0].mxu0
    %v138 = vadd.f32 0.0, %v137
    %v139 = vpop.f32.mrb[0].mxu0
    %v140 = vadd.f32 0.0, %v139
    %141 = vdwg.mxu0
    %v142 = vxor.u32 %v138, 2147483648
    %v143 = vxor.u32 %v140, 2147483648
    %v144 = vmul.f32 %v142, 1.442695
    %v145 = vpow.pop %v144
    %v146 = vmul.f32 %v143, 1.442695
    %v147 = vpow.pop %v146
    %v148 = vadd.f32 %v145, 1.0
    %v149 = vadd.f32 %v147, 1.0
    %v150 = vrcp.pop %v148
    %v151 = vmul.f32 1.0, %v150
    %v152 = vrcp.pop %v149
    %v153 = vmul.f32 1.0, %v152
    %v154 = vtanh.pop %v140
    %v155 = vld [vmem:[%s2] sm:$0x3]
    %157 = vrot.lane.b32.xlu0 %v155, 64
    %v158 = vpop.permute.xlu0 %157
    %v160 = vmul.f32 %v151, %v158
    %v161 = vmul.f32 %v151, %v154
    %163 = vrot.lane.b32.xlu0 %v161, 64
    %v164 = vpop.permute.xlu0 %163
    %v166 = vadd.f32 %v160, %v164
    %v167 = vtanh.pop %v166
    %v168 = vmul.f32 %v153, %v167
    %v169 = vld [vmem:[%s3] sm:$0xff]
    %v170 = vld [vmem:[%s3 + $0x8] sm:$0xff]
    %v171 = vld [vmem:[%s3 + $0x10] sm:$0xff]
    %v172 = vld [vmem:[%s3 + $0x18] sm:$0xff]
    %v173 = vld [vmem:[%s3 + $0x20] sm:$0xff]
    %v174 = vld [vmem:[%s3 + $0x28] sm:$0xff]
    %v175 = vld [vmem:[%s3 + $0x30] sm:$0xff]
    %v176 = vld [vmem:[%s3 + $0x38] sm:$0xff]
    %v177 = vld [vmem:[%s4] sm:$0x1]
    %v179 = vlaneseq
    %v180 = vshrl.u32 %v179, 7
    %v181 = vsub.s32 0, %v180
    %v182 = vrot.slane %v177, %v181
    %185 = vrot.lane.b32.xlu0 %v168, 64
    %v186 = vpop.permute.xlu0 %185
    %vm187 = vcmask 523264
    %v188 = vsel %vm187, %v186, 0
    %190 = vmatprep.subr.mxu0 0.0
    %191 = vmatpush1.msra.mxu0 %v169
    %192 = vmatprep.subr.mxu0 0.0
    %193 = vmatpush1.msra.mxu0 %v170
    %194 = vmatprep.subr.mxu0 0.0
    %195 = vmatpush1.msra.mxu0 %v171
    %196 = vmatprep.subr.mxu0 0.0
    %197 = vmatpush1.msra.mxu0 %v172
    %198 = vmatprep.subr.mxu0 0.0
    %199 = vmatpush1.msra.mxu0 %v173
    %200 = vmatprep.subr.mxu0 0.0
    %201 = vmatpush1.msra.mxu0 %v174
    %202 = vmatprep.subr.mxu0 0.0
    %203 = vmatpush1.msra.mxu0 %v175
    %204 = vmatprep.subr.mxu0 0.0
    %205 = vmatpush1.msra.mxu0 %v176
    %206 = vmatprep.subr.mxu0 0.0
    %207 = vmatpush1.msra.mxu0 0.0
    %208 = vmatprep.subr.mxu0 0.0
    %209 = vmatpush1.msra.mxu0 0.0
    %210 = vmatprep.subr.mxu0 0.0
    %211 = vmatpush1.msra.mxu0 0.0
    %212 = vmatprep.subr.mxu0 0.0
    %213 = vmatpush1.msra.mxu0 0.0
    %214 = vmatprep.subr.mxu0 0.0
    %215 = vmatpush1.msra.mxu0 0.0
    %216 = vmatprep.subr.mxu0 0.0
    %217 = vmatpush1.msra.mxu0 0.0
    %218 = vmatprep.subr.mxu0 0.0
    %219 = vmatpush1.msra.mxu0 0.0
    %220 = vmatprep.subr.mxu0 0.0
    %221 = vmatpush1.msra.mxu0 0.0
    %222 = vmatprep.subr.mxu0 0.0
    %223 = vmatpush1.msra.mxu0 0.0
    %224 = vmatprep.subr.mxu0 0.0
    %225 = vmatpush1.msra.mxu0 0.0
    %226 = vmatprep.subr.mxu0 0.0
    %227 = vmatpush1.msra.mxu0 0.0
    %228 = vmatprep.subr.mxu0 0.0
    %229 = vmatpush1.msra.mxu0 0.0
    %230 = vmatprep.subr.mxu0 0.0
    %231 = vmatpush1.msra.mxu0 0.0
    %232 = vmatprep.subr.mxu0 0.0
    %233 = vmatpush1.msra.mxu0 0.0
    %234 = vmatprep.subr.mxu0 0.0
    %235 = vmatpush1.msra.mxu0 0.0
    %236 = vmatprep.subr.mxu0 0.0
    %237 = vmatpush1.msra.mxu0 0.0
    %238 = vmatprep.subr.mxu0 0.0
    %239 = vmatpush1.msra.mxu0 0.0
    %240 = vmatprep.subr.mxu0 0.0
    %241 = vmatpush1.msra.mxu0 0.0
    %242 = vmatprep.subr.mxu0 0.0
    %243 = vmatpush1.msra.mxu0 0.0
    %244 = vmatprep.subr.mxu0 0.0
    %245 = vmatpush1.msra.mxu0 0.0
    %246 = vmatprep.subr.mxu0 0.0
    %247 = vmatpush1.msra.mxu0 0.0
    %248 = vmatprep.subr.mxu0 0.0
    %249 = vmatpush1.msra.mxu0 0.0
    %250 = vmatprep.subr.mxu0 0.0
    %251 = vmatpush1.msra.mxu0 0.0
    %252 = vmatprep.subr.mxu0 0.0
    %253 = vmatpush1.msra.mxu0 0.0
    %254 = vmatprep.mubr.f32.mxu0 0.0
    %255 = vmatmul.mubr.f32.gmra.mrb[0].mxu0 %v188
    %v256 = vpop.f32.mrb[0].mxu0
    %v257 = vadd.f32 %v182, %v256
    %v258 = vpop.f32.mrb[0].mxu0
    %259 = vdwg.mxu0
    %v260 = vtanh.pop %v257
    %vm261 = vcmask 254976
    %262 = vst.msk [vmem:[#allocation5] sm:$0x3] %vm261, %v260
    %vm264 = vcmask 517120
    %265 = vst.msk [vmem:[#allocation6] sm:$0x3] %vm264, %v186
    %vm266 = vcmask 1041920
    %267 = vst.msk [vmem:[#allocation6] sm:$0x3] %vm266, %v166
    // Predicated region
    $region26: #{tpu_custom_call.1} parent=1 // pred_check
      _
    $region27: #{tpu_custom_call.1} parent=1 // pred_check_branch
      %269 = sbr.rel (0) target = $region29
    $region28: #{tpu_custom_call.1} parent=1 // pred_region
      %s271 = ssub.s32 32, 32
      %272 = vsyncadd [#allocation4], %s271
      %s274 = sshll.u32 [#allocation5], 4
      %s275 = int_to_ptr.vmem [resolvable:$true] %s274
      %277 = dma.vmem_to_hbm [thread:$0]  %s275, 32, %s5, [#allocation4]
    $region29: #{tpu_custom_call.1} parent=1 // pred_fallthru
      _
    // Predicated region
    $region30: #{tpu_custom_call.1} parent=1 // pred_check
      _
    $region31: #{tpu_custom_call.1} parent=1 // pred_check_branch
      %279 = sbr.rel (0) target = $region33
    $region32: #{tpu_custom_call.1} parent=1 // pred_region
      %s281 = ssub.s32 32, 32
      %282 = vsyncadd [#allocation7], %s281
      %s284 = sshll.u32 [#allocation6], 4
      %s285 = int_to_ptr.vmem [resolvable:$true] %s284
      %287 = dma.vmem_to_hbm [thread:$0]  %s285, 32, %s6, [#allocation7]
    $region33: #{tpu_custom_call.1} parent=1 // pred_fallthru
      _
    // Predicated region
    $region34: #{tpu_custom_call.1} parent=1 // pred_check
      _
    $region35: #{tpu_custom_call.1} parent=1 // pred_check_branch
      %289 = sbr.rel (0) target = $region37
    $region36: #{tpu_custom_call.1} parent=1 // pred_region
      %290 = dma.done [#allocation4], 32
    $region37: #{tpu_custom_call.1} parent=1 // pred_fallthru
      _
    // Predicated region
    $region38: #{tpu_custom_call.1} parent=1 // pred_check
      _
    $region39: #{tpu_custom_call.1} parent=1 // pred_check_branch
      %292 = sbr.rel (0) target = $region41
    $region40: #{tpu_custom_call.1} parent=1 // pred_region
      %293 = dma.done [#allocation7], 32
    $region41: #{tpu_custom_call.1} parent=1 // pred_fallthru
      _
    %294 = vsyncpa [#allocation3], 1
    %295 = vsyncpa [#allocation4], 1
    %296 = vsyncpa [#allocation7], 1

</llo_original>
